<compile_context>
chip_gen: v7x
topology: tpu7x:2x2x1
jax: 0.10.0
libtpu: 0.0.40
codegen_flags: <defaults>
</compile_context>

<pallas_src>
import jax
import jax.numpy as jnp
from jax import lax
from jax.experimental import pallas as pl
from jax.experimental.pallas import tpu as pltpu

_LANES = 128
_ROW_ALIGN = 32    # sublane alignment valid for f32 (8), bf16 (16), int8/fp8 (32)
_MIN_STEPS = 4     # keep >= this many pipeline steps per core when possible


def _round_up(x, m):
    return ((x + m - 1) // m) * m


def _num_tensorcores():
    """TensorCores per chip: 2 on v7x, 1 on v5e/v6e. Conservative fallback = 1."""
    try:
        kind = jax.devices()[0].device_kind.lower()
    except Exception:
        return 1
    return 2 if ("v7" in kind or "7x" in kind) else 1


def _make_kernel(br, rows):
    """Kernel closure over static block-rows `br` and total valid `rows`."""

    def kernel(s_ref, t_ref, acc_ref):
        pi = pl.program_id(0)
        ji = pl.program_id(1)
        steps = pl.num_programs(1)

        @pl.when(ji == 0)
        def _():
            acc_ref[...] = jnp.zeros_like(acc_ref)

        s = s_ref[...].astype(jnp.float32)          # (br, 128)
        t = t_ref[...].astype(jnp.float32)
        # s*(1-t) + (1-s)*t  ==  s + t - 2*s*t  (same value, fewer VALU ops)
        err = s + t - 2.0 * (s * t)

        blk = pi * steps + ji                        # logical (unclamped) block idx
        is_full = (blk + 1) * br <= rows             # block entirely in range?

        def accumulate(e):
            if br % 8 == 0:
                # Fold vreg-wise: each (8,128) slice is one f32 vreg.
                acc_ref[...] += e.reshape(br // 8, 8, _LANES).sum(axis=0)
            else:
                # Tiny single-block path (rows < _ROW_ALIGN): cheap sublane reduce.
                acc_ref[0:1, :] += e.sum(axis=0, keepdims=True)

        @pl.when(is_full)
        def _():
            accumulate(err)

        @pl.when(jnp.logical_not(is_full))
        def _():
            # Ragged last block (or fully out-of-range duplicate block on the
            # second core): zero invalid rows BEFORE accumulating, since the
            # out-of-bounds part of the DMA'd block is unspecified.
            row_ids = blk * br + lax.broadcasted_iota(jnp.int32, (br, _LANES), 0)
            accumulate(jnp.where(row_ids < rows, err, 0.0))

    return kernel


def _hamming_partial_sum(s2d, t2d, block_bytes, num_parallel):
    """Sum of errors over a lane-dense (rows, 128) pair of arrays via Pallas."""
    rows = s2d.shape[0]
    itemsize = max(jnp.dtype(s2d.dtype).itemsize, jnp.dtype(t2d.dtype).itemsize)

    cores = _num_tensorcores() if num_parallel is None else max(1, int(num_parallel))

    if rows < _ROW_ALIGN:
        # Single block equal to the full array extent (always a legal block shape).
        par = 1
        br = rows
    else:
        par = cores if (cores > 1 and rows >= cores * _MIN_STEPS * _ROW_ALIGN) else 1
        # ~block_bytes of input per grid step (dtype-aware), sublane-aligned.
        target_rows = max(_ROW_ALIGN,
                          _round_up(block_bytes // (_LANES * itemsize), _ROW_ALIGN))
        per_core = pl.cdiv(rows, par)
        br = min(target_rows, (rows // _ROW_ALIGN) * _ROW_ALIGN)
        if per_core >= _MIN_STEPS * _ROW_ALIGN:
            # Keep >= _MIN_STEPS pipeline steps per core so DMAs stay overlapped.
            br = min(br, _round_up(pl.cdiv(per_core, _MIN_STEPS), _ROW_ALIGN))
        br = max(br, _ROW_ALIGN)

    nblocks = pl.cdiv(rows, br)
    steps = pl.cdiv(nblocks, par)

    def in_map(pi, ji):
        # Clamp so the DMA'd block always starts in-bounds; duplicate/ragged
        # blocks are neutralized by the in-kernel row mask (logical index).
        return (jnp.minimum(pi * steps + ji, nblocks - 1), 0)

    in_spec = pl.BlockSpec((br, _LANES), in_map)

    # 2 inputs x 2 pipeline buffers x block + tiny accumulator; leave headroom,
    # but never ask for more than v7x's 64 MiB physical VMEM.
    block_bytes_actual = br * _LANES * itemsize
    vmem_limit = min(64 * 1024 * 1024,
                     max(32 * 1024 * 1024, 6 * block_bytes_actual))

    partial = pl.pallas_call(
        _make_kernel(br, rows),
        out_shape=jax.ShapeDtypeStruct((par * 8, _LANES), jnp.float32),
        grid_spec=pltpu.PrefetchScalarGridSpec(
            num_scalar_prefetch=0,
            grid=(par, steps),
            in_specs=[in_spec, in_spec],
            out_specs=pl.BlockSpec((8, _LANES), lambda pi, ji: (pi, 0)),
        ),
        compiler_params=pltpu.CompilerParams(
            dimension_semantics=("parallel", "arbitrary"),
            vmem_limit_bytes=vmem_limit,
        ),
    )(s2d, t2d)

    return jnp.sum(partial)


def hamming_loss(suggested, target, *, block_bytes=2 * 1024 * 1024, num_parallel=None):
    """Pallas implementation of HammingLoss.forward.

    suggested, target: same shape, leading dim = batch. Any float dtype
    (bf16 is streamed as-is and cast to f32 inside the kernel).
    Returns scalar f32: (suggested*(1-target)+(1-suggested)*target).mean(0).sum()
    """
    assert suggested.shape == target.shape, "shape mismatch"
    batch = suggested.shape[0]
    n_elem = int(suggested.size)

    s_flat = suggested.reshape(-1)   # free bitcast (row-major)
    t_flat = target.reshape(-1)

    rows = n_elem // _LANES
    n_main = rows * _LANES
    tail = n_elem - n_main

    total = jnp.float32(0.0)

    if rows > 0:
        if tail == 0:
            s2d = s_flat.reshape(rows, _LANES)       # free
            t2d = t_flat.reshape(rows, _LANES)
        else:
            # Rare ragged-total case: prefix slice (may cost one copy of the
            # main part) + lane-dense reshape; still far cheaper than padding.
            s2d = s_flat[:n_main].reshape(rows, _LANES)
            t2d = t_flat[:n_main].reshape(rows, _LANES)
        total = total + _hamming_partial_sum(s2d, t2d, block_bytes, num_parallel)

    if tail > 0:
        # <128-element tail: trivial plain-JAX sum.
        st = s_flat[n_main:].astype(jnp.float32)
        tt = t_flat[n_main:].astype(jnp.float32)
        total = total + jnp.sum(st + tt - 2.0 * (st * tt))

    return total / batch


def _reference_hamming_loss(suggested, target):
    """Pure-JAX reference mirroring the PyTorch module."""
    s = jnp.asarray(suggested, jnp.float32)
    t = jnp.asarray(target, jnp.float32)
    errors = s * (1.0 - t) + (1.0 - s) * t
    return errors.mean(axis=0).sum()


if __name__ == "__main__":
    key = jax.random.PRNGKey(0)
    k1, k2, k3, k4 = jax.random.split(key, 4)

    # 1) Primary small demo: f32, lane-exact rows, normal kernel path.
    B, N, M = 2, 64, 64
    suggested = jax.random.uniform(k1, (B, N, M), dtype=jnp.float32)
    target = (jax.random.uniform(k2, (B, N, M)) > 0.9).astype(jnp.float32)
    out = jax.block_until_ready(hamming_loss(suggested, target))
    ref = _reference_hamming_loss(suggested, target)
    assert jnp.allclose(out, ref, rtol=1e-5, atol=1e-5), (out, ref)

    # 2) Same data streamed in bf16 (native-dtype path, cast to f32 in-kernel).
    out_bf = jax.block_until_ready(
        hamming_loss(suggested.astype(jnp.bfloat16), target.astype(jnp.bfloat16)))
    ref_bf = _reference_hamming_loss(suggested.astype(jnp.bfloat16),
                                     target.astype(jnp.bfloat16))
    assert jnp.allclose(out_bf, ref_bf, rtol=1e-2, atol=1e-2), (out_bf, ref_bf)

    # 3) Tiny permutation-matrix case (2x8x8 = 128 elems -> single (1,128) block).
    Bp, Np = 2, 8
    sp = jax.random.uniform(k3, (Bp, Np, Np), dtype=jnp.float32)
    eye = jnp.eye(Np, dtype=jnp.float32)
    tp = jnp.stack([eye, eye[::-1, :]], axis=0)
    out_p = jax.block_until_ready(hamming_loss(sp, tp))
    ref_p = _reference_hamming_loss(sp, tp)
    assert jnp.allclose(out_p, ref_p, rtol=1e-5, atol=1e-5), (out_p, ref_p)

    # 4) Ragged last block + <128-element tail: 2x70x99 = 13860 = 108*128 + 36.
    s4 = jax.random.uniform(k3, (2, 70, 99), dtype=jnp.float32)
    t4 = (jax.random.uniform(k4, (2, 70, 99)) > 0.8).astype(jnp.float32)
    out4 = jax.block_until_ready(hamming_loss(s4, t4))
    ref4 = _reference_hamming_loss(s4, t4)
    assert jnp.allclose(out4, ref4, rtol=1e-4, atol=1e-4), (out4, ref4)

    # 5) Multi-step grid with exact 128 division (4x96x96 -> 288 rows).
    s5 = jax.random.uniform(k4, (4, 96, 96), dtype=jnp.float32)
    t5 = (jax.random.uniform(k1, (4, 96, 96)) > 0.9).astype(jnp.float32)
    out5 = jax.block_until_ready(hamming_loss(s5, t5))
    ref5 = _reference_hamming_loss(s5, t5)
    assert jnp.allclose(out5, ref5, rtol=1e-4, atol=1e-4), (out5, ref5)

    print("KERNEL_OK")
</pallas_src>

<mosaic_0001>
module attributes {stable_mosaic.version = 11 : i64} {
  func.func @kernel(%arg0: i32, %arg1: i32, %arg2: memref<64x128xf32, #tpu.memory_space<vmem>>, %arg3: memref<64x128xf32, #tpu.memory_space<vmem>>, %arg4: memref<8x128xf32, #tpu.memory_space<vmem>>) attributes {dimension_semantics = [#tpu.dimension_semantics<parallel>, #tpu.dimension_semantics<arbitrary>], iteration_bounds = array<i64: 1, 1>, scalar_prefetch = 0 : i64, scratch_operands = 0 : i64, tpu.core_type = #tpu.core_type<tc>, window_params = [{transform_indices = @transform_0, window_bounds = array<i64: 64, 128>}, {transform_indices = @transform_1, window_bounds = array<i64: 64, 128>}, {transform_indices = @transform_2, window_bounds = array<i64: 8, 128>}]} {
    %c0_i32 = arith.constant 0 : i32
    %0 = arith.cmpi eq, %arg1, %c0_i32 : i32
    %1 = arith.extui %0 : i1 to i32
    %c0_i32_0 = arith.constant 0 : i32
    %2 = arith.cmpi ne, %1, %c0_i32_0 : i32
    scf.if %2 {
      %cst_8 = arith.constant 0.000000e+00 : f32
      %20 = vector.broadcast %cst_8 : f32 to vector<8x128xf32>
      %c0_9 = arith.constant 0 : index
      %c0_10 = arith.constant 0 : index
      %21 = vector.load %arg4[%c0_9, %c0_10] : memref<8x128xf32, #tpu.memory_space<vmem>>, vector<8x128xf32>
      tpu.vector_store %arg4[%c0_9, %c0_10], %20 {strides = array<i32>} : memref<8x128xf32, #tpu.memory_space<vmem>>, vector<8x128xf32>,
    } else {
    }
    %c0 = arith.constant 0 : index
    %c0_1 = arith.constant 0 : index
    %3 = vector.load %arg2[%c0, %c0_1] : memref<64x128xf32, #tpu.memory_space<vmem>>, vector<64x128xf32>
    %c0_2 = arith.constant 0 : index
    %c0_3 = arith.constant 0 : index
    %4 = vector.load %arg3[%c0_2, %c0_3] : memref<64x128xf32, #tpu.memory_space<vmem>>, vector<64x128xf32>
    %5 = arith.addf %3, %4 : vector<64x128xf32>
    %6 = arith.mulf %3, %4 : vector<64x128xf32>
    %cst = arith.constant 2.000000e+00 : f32
    %7 = vector.broadcast %cst : f32 to vector<64x128xf32>
    %8 = arith.mulf %7, %6 : vector<64x128xf32>
    %9 = arith.subf %5, %8 : vector<64x128xf32>
    %c1_i32 = arith.constant 1 : i32
    %10 = arith.muli %arg0, %c1_i32 : i32
    %11 = arith.addi %10, %arg1 : i32
    %c1_i32_4 = arith.constant 1 : i32
    %12 = arith.addi %11, %c1_i32_4 : i32
    %c64_i32 = arith.constant 64 : i32
    %13 = arith.muli %12, %c64_i32 : i32
    %c64_i32_5 = arith.constant 64 : i32
    %14 = arith.cmpi sle, %13, %c64_i32_5 : i32
    %15 = arith.extui %14 : i1 to i32
    %c0_i32_6 = arith.constant 0 : i32
    %16 = arith.cmpi ne, %15, %c0_i32_6 : i32
    scf.if %16 {
      %c0_8 = arith.constant 0 : index
      %c0_9 = arith.constant 0 : index
      %20 = vector.load %arg4[%c0_8, %c0_9] : memref<8x128xf32, #tpu.memory_space<vmem>>, vector<8x128xf32>
      %21 = vector.shape_cast %9 : vector<64x128xf32> to vector<8x8x128xf32>
      %cst_10 = arith.constant dense<0.000000e+00> : vector<8x128xf32>
      %22 = vector.multi_reduction <add>, %21, %cst_10 [0] : vector<8x8x128xf32> to vector<8x128xf32>
      %23 = arith.addf %20, %22 : vector<8x128xf32>
      %c0_11 = arith.constant 0 : index
      %c0_12 = arith.constant 0 : index
      %24 = vector.load %arg4[%c0_11, %c0_12] : memref<8x128xf32, #tpu.memory_space<vmem>>, vector<8x128xf32>
      tpu.vector_store %arg4[%c0_11, %c0_12], %23 {strides = array<i32>} : memref<8x128xf32, #tpu.memory_space<vmem>>, vector<8x128xf32>,
    } else {
    }
    %true = arith.constant true
    %17 = arith.xori %14, %true : i1
    %18 = arith.extui %17 : i1 to i32
    %c0_i32_7 = arith.constant 0 : i32
    %19 = arith.cmpi ne, %18, %c0_i32_7 : i32
    scf.if %19 {
      %c64_i32_8 = arith.constant 64 : i32
      %20 = arith.muli %11, %c64_i32_8 : i32
      %21 = tpu.iota {dimensions = array<i32: 0>} : vector<64x128xi32>
      %22 = vector.broadcast %20 : i32 to vector<64x128xi32>
      %23 = arith.addi %22, %21 : vector<64x128xi32>
      %c64_i32_9 = arith.constant 64 : i32
      %24 = vector.broadcast %c64_i32_9 : i32 to vector<64x128xi32>
      %25 = arith.cmpi slt, %23, %24 : vector<64x128xi32>
      %cst_10 = arith.constant 0.000000e+00 : f32
      %26 = vector.broadcast %cst_10 : f32 to vector<64x128xf32>
      %27 = arith.select %25, %9, %26 : vector<64x128xi1>, vector<64x128xf32>
      %c0_11 = arith.constant 0 : index
      %c0_12 = arith.constant 0 : index
      %28 = vector.load %arg4[%c0_11, %c0_12] : memref<8x128xf32, #tpu.memory_space<vmem>>, vector<8x128xf32>
      %29 = vector.shape_cast %27 : vector<64x128xf32> to vector<8x8x128xf32>
      %cst_13 = arith.constant dense<0.000000e+00> : vector<8x128xf32>
      %30 = vector.multi_reduction <add>, %29, %cst_13 [0] : vector<8x8x128xf32> to vector<8x128xf32>
      %31 = arith.addf %28, %30 : vector<8x128xf32>
      %c0_14 = arith.constant 0 : index
      %c0_15 = arith.constant 0 : index
      %32 = vector.load %arg4[%c0_14, %c0_15] : memref<8x128xf32, #tpu.memory_space<vmem>>, vector<8x128xf32>
      tpu.vector_store %arg4[%c0_14, %c0_15], %31 {strides = array<i32>} : memref<8x128xf32, #tpu.memory_space<vmem>>, vector<8x128xf32>,
    } else {
    }
    return
  }
  func.func @transform_0(%arg0: i32, %arg1: i32) -> (i32, i32) {
    %c1_i32 = arith.constant 1 : i32
    %0 = arith.muli %arg0, %c1_i32 : i32
    %1 = arith.addi %0, %arg1 : i32
    %c0_i32 = arith.constant 0 : i32
    %2 = arith.minsi %1, %c0_i32 : i32
    %c0_i32_0 = arith.constant 0 : i32
    %c0_i32_1 = arith.constant 0 : i32
    return %2, %c0_i32_0 : i32, i32
  }
  func.func @transform_1(%arg0: i32, %arg1: i32) -> (i32, i32) {
    %c1_i32 = arith.constant 1 : i32
    %0 = arith.muli %arg0, %c1_i32 : i32
    %1 = arith.addi %0, %arg1 : i32
    %c0_i32 = arith.constant 0 : i32
    %2 = arith.minsi %1, %c0_i32 : i32
    %c0_i32_0 = arith.constant 0 : i32
    %c0_i32_1 = arith.constant 0 : i32
    return %2, %c0_i32_0 : i32, i32
  }
  func.func @transform_2(%arg0: i32, %arg1: i32) -> (i32, i32) {
    %c0_i32 = arith.constant 0 : i32
    %c0_i32_0 = arith.constant 0 : i32
    return %arg0, %c0_i32 : i32, i32
  }
}

</mosaic_0001>

<llo_original>
// kernel: tpu_custom_call.1
$region0: #{tpu_custom_call.1}
  #allocation0 [shape = 'u32[]', space=smem, size = 0x4, offset = 0x4, fixed_abs, tag = 'smem constant byte address 0x4 - core index']
  #allocation1 [shape = 'u32[144,128]{1,0:T(1,128)}', space=vmem, size = 0x12000, scoped, tag = 'internal scratch']
  %s0 = inlined_call_operand.hbm [shape: f32[64,128], index: 0, kind: input, shape index: {}]
  %s1 = inlined_call_operand.hbm [shape: f32[64,128], index: 1, kind: input, shape index: {}]
  %s2 = inlined_call_operand.hbm [shape: f32[8,128], index: 2, kind: output, shape index: {}]
  %s3 = sld [smem:[#allocation0]]
  $region38: #{tpu_custom_call.1} parent=0
    _
  %s5 = ssub.s32 1, %s3
  %s6 = scalar_select 0, %s5, %s3
  $region1: #{tpu_custom_call.1} parent=0
    #allocation2 [shape = 'u8[32768]{0}', space=vmem, size = 0x8000, scoped, tag = 'input window, operand 0, single buffered']
    #allocation3 [shape = 's32[1]{0}', space=sflag, size = 0x4, scoped, tag = 'scoped memory for tpu_custom_call.1']
    #allocation4 [shape = 's32[1]{0}', space=sflag, size = 0x4, scoped, tag = 'scoped memory for tpu_custom_call.1']
    #allocation5 [shape = 'u8[32768]{0}', space=vmem, size = 0x8000, scoped, tag = 'input window, operand 1, single buffered']
    #allocation6 [shape = 's32[1]{0}', space=sflag, size = 0x4, scoped, tag = 'scoped memory for tpu_custom_call.1']
    #allocation7 [shape = 'u8[4096]{0}', space=vmem, size = 0x1000, scoped, tag = 'output window, operand 0, single buffered']
    %7 = vsyncpa [#allocation3], 0
    %8 = vsyncpa [#allocation6], 0
    %9 = vsyncpa [#allocation4], 0
    // Predicated region
    $region2: #{tpu_custom_call.1} parent=1 // pred_check
      _
    $region3: #{tpu_custom_call.1} parent=1 // pred_check_branch
      %11 = sbr.rel (0) target = $region5
    $region4: #{tpu_custom_call.1} parent=1 // pred_region
      %s12 = sadd.s32 0, 0
      %p13 = scmp.lt.s32.totalorder %s12, 0
      %s14 = scalar_select %p13, %s12, 0
      %s15 = smul.u32 8, %s14
      %s17 = ssub.s32 1024, 1024
      %18 = vsyncadd [#allocation3], %s17
      %s19 = smul.addr %s15, 128
      %s20 = scalar_lea.hbm %s0, %s19
      %s21 = sshll.u32 [#allocation2], 4
      %s22 = int_to_ptr.vmem [resolvable:$true] %s21
      %27 = dma.hbm_to_vmem [thread:$0]  %s20, 1024, %s22, [#allocation3], 128, 128, 8
    $region5: #{tpu_custom_call.1} parent=1 // pred_fallthru
      _
    // Predicated region
    $region6: #{tpu_custom_call.1} parent=1 // pred_check
      _
    $region7: #{tpu_custom_call.1} parent=1 // pred_check_branch
      %29 = sbr.rel (0) target = $region9
    $region8: #{tpu_custom_call.1} parent=1 // pred_region
      %s30 = sadd.s32 0, 0
      %p31 = scmp.lt.s32.totalorder %s30, 0
      %s32 = scalar_select %p31, %s30, 0
      %s33 = smul.u32 8, %s32
      %s35 = ssub.s32 1024, 1024
      %36 = vsyncadd [#allocation6], %s35
      %s37 = smul.addr %s33, 128
      %s38 = scalar_lea.hbm %s1, %s37
      %s39 = sshll.u32 [#allocation5], 4
      %s40 = int_to_ptr.vmem [resolvable:$true] %s39
      %45 = dma.hbm_to_vmem [thread:$0]  %s38, 1024, %s40, [#allocation6], 128, 128, 8
    $region9: #{tpu_custom_call.1} parent=1 // pred_fallthru
      _
    // Predicated region
    $region10: #{tpu_custom_call.1} parent=1 // pred_check
      _
    $region11: #{tpu_custom_call.1} parent=1 // pred_check_branch
      %47 = sbr.rel (0) target = $region13
    $region12: #{tpu_custom_call.1} parent=1 // pred_region
      %48 = dma.done [#allocation3], 1024
    $region13: #{tpu_custom_call.1} parent=1 // pred_fallthru
      _
    // Predicated region
    $region14: #{tpu_custom_call.1} parent=1 // pred_check
      _
    $region15: #{tpu_custom_call.1} parent=1 // pred_check_branch
      %50 = sbr.rel (0) target = $region17
    $region16: #{tpu_custom_call.1} parent=1 // pred_region
      %51 = dma.done [#allocation6], 1024
    $region17: #{tpu_custom_call.1} parent=1 // pred_fallthru
      _
    %s52 = sadd.s32 0, 0
    %p53 = scmp.lt.s32.totalorder %s52, 0
    %s54 = scalar_select %p53, %s52, 0
    %s55 = smul.u32 8, %s54
    %s56 = sadd.s32 0, 0
    %p57 = scmp.lt.s32.totalorder %s56, 0
    %s58 = scalar_select %p57, %s56, 0
    %s59 = smul.u32 8, %s58
    %p60 = scmp.eq.s32.totalorder 0, 0
    // Predicated region
    $region18: #{tpu_custom_call.1} parent=1 // pred_check
      %p61 = pneg %p60
    $region19: #{tpu_custom_call.1} parent=1 // pred_check_branch
      %63 = sbr.rel (%p61) target = $region21
    $region20: #{tpu_custom_call.1} parent=1 // pred_region
      %64 = vst [vmem:[#allocation7] sm:$0xff] 0.0
    $region21: #{tpu_custom_call.1} parent=1 // pred_fallthru
      _
    %v65 = vld [vmem:[#allocation2] sm:$0xff]
    %v66 = vld [vmem:[#allocation2 + $0x8] sm:$0xff]
    %v67 = vld [vmem:[#allocation2 + $0x10] sm:$0xff]
    %v68 = vld [vmem:[#allocation2 + $0x18] sm:$0xff]
    %v69 = vld [vmem:[#allocation2 + $0x20] sm:$0xff]
    %v70 = vld [vmem:[#allocation2 + $0x28] sm:$0xff]
    %v71 = vld [vmem:[#allocation2 + $0x30] sm:$0xff]
    %v72 = vld [vmem:[#allocation2 + $0x38] sm:$0xff]
    %v73 = vld [vmem:[#allocation5] sm:$0xff]
    %v74 = vld [vmem:[#allocation5 + $0x8] sm:$0xff]
    %v75 = vld [vmem:[#allocation5 + $0x10] sm:$0xff]
    %v76 = vld [vmem:[#allocation5 + $0x18] sm:$0xff]
    %v77 = vld [vmem:[#allocation5 + $0x20] sm:$0xff]
    %v78 = vld [vmem:[#allocation5 + $0x28] sm:$0xff]
    %v79 = vld [vmem:[#allocation5 + $0x30] sm:$0xff]
    %v80 = vld [vmem:[#allocation5 + $0x38] sm:$0xff]
    %v81 = vadd.f32 %v65, %v73
    %v82 = vadd.f32 %v66, %v74
    %v83 = vadd.f32 %v67, %v75
    %v84 = vadd.f32 %v68, %v76
    %v85 = vadd.f32 %v69, %v77
    %v86 = vadd.f32 %v70, %v78
    %v87 = vadd.f32 %v71, %v79
    %v88 = vadd.f32 %v72, %v80
    %v89 = vmul.f32 %v65, %v73
    %v90 = vmul.f32 %v66, %v74
    %v91 = vmul.f32 %v67, %v75
    %v92 = vmul.f32 %v68, %v76
    %v93 = vmul.f32 %v69, %v77
    %v94 = vmul.f32 %v70, %v78
    %v95 = vmul.f32 %v71, %v79
    %v96 = vmul.f32 %v72, %v80
    %v97 = vmul.f32 %v89, 2.0
    %v98 = vmul.f32 %v90, 2.0
    %v99 = vmul.f32 %v91, 2.0
    %v100 = vmul.f32 %v92, 2.0
    %v101 = vmul.f32 %v93, 2.0
    %v102 = vmul.f32 %v94, 2.0
    %v103 = vmul.f32 %v95, 2.0
    %v104 = vmul.f32 %v96, 2.0
    %v105 = vsub.f32 %v81, %v97
    %v106 = vsub.f32 %v82, %v98
    %v107 = vsub.f32 %v83, %v99
    %v108 = vsub.f32 %v84, %v100
    %v109 = vsub.f32 %v85, %v101
    %v110 = vsub.f32 %v86, %v102
    %v111 = vsub.f32 %v87, %v103
    %v112 = vsub.f32 %v88, %v104
    %s113 = sadd.s32 0, 0
    %s114 = sadd.s32 %s113, 1
    %s115 = smul.u32 %s114, 64
    %p116 = scmp.le.s32.totalorder %s115, 64
    // Predicated region
    $region22: #{tpu_custom_call.1} parent=1 // pred_check
      %p117 = pneg %p116
    $region23: #{tpu_custom_call.1} parent=1 // pred_check_branch
      %119 = sbr.rel (%p117) target = $region25
    $region24: #{tpu_custom_call.1} parent=1 // pred_region
      %v120 = vld [vmem:[#allocation7] sm:$0xff]
      %v121 = vadd.f32 %v105, %v106
      %v122 = vadd.f32 %v121, %v107
      %v123 = vadd.f32 %v122, %v108
      %v124 = vadd.f32 %v123, %v109
      %v125 = vadd.f32 %v124, %v110
      %v126 = vadd.f32 %v125, %v111
      %v127 = vadd.f32 %v126, %v112
      %v128 = vadd.f32 %v120, %v127
      %129 = vst [vmem:[#allocation7] sm:$0xff] %v128
    $region25: #{tpu_custom_call.1} parent=1 // pred_fallthru
      _
    %p130 = scmp.gt.s32.totalorder %s115, 64
    // Predicated region
    $region26: #{tpu_custom_call.1} parent=1 // pred_check
      %p131 = pneg %p130
    $region27: #{tpu_custom_call.1} parent=1 // pred_check_branch
      %133 = sbr.rel (%p131) target = $region29
    $region28: #{tpu_custom_call.1} parent=1 // pred_region
      %s134 = smul.u32 %s113, 64
      %v135 = vlaneseq
      %v136 = vshrl.u32 %v135, 7
      %v137 = vadd.s32 %v136, 8
      %v138 = vadd.s32 %v136, 16
      %v139 = vadd.s32 %v136, 24
      %v140 = vadd.s32 %v136, 32
      %v141 = vadd.s32 %v136, 40
      %v142 = vadd.s32 %v136, 48
      %v143 = vadd.s32 %v136, 56
      %v144 = vstv %s134
      %v145 = vadd.s32 %v144, %v136
      %v146 = vadd.s32 %v144, %v137
      %v147 = vadd.s32 %v144, %v138
      %v148 = vadd.s32 %v144, %v139
      %v149 = vadd.s32 %v144, %v140
      %v150 = vadd.s32 %v144, %v141
      %v151 = vadd.s32 %v144, %v142
      %v152 = vadd.s32 %v144, %v143
      %vm153 = vcmp.lt.s32.totalorder %v145, 64
      %vm154 = vcmp.lt.s32.totalorder %v146, 64
      %vm155 = vcmp.lt.s32.totalorder %v147, 64
      %vm156 = vcmp.lt.s32.totalorder %v148, 64
      %vm157 = vcmp.lt.s32.totalorder %v149, 64
      %vm158 = vcmp.lt.s32.totalorder %v150, 64
      %vm159 = vcmp.lt.s32.totalorder %v151, 64
      %vm160 = vcmp.lt.s32.totalorder %v152, 64
      %v161 = vsel %vm153, %v105, 0.0
      %v162 = vsel %vm154, %v106, 0.0
      %v163 = vsel %vm155, %v107, 0.0
      %v164 = vsel %vm156, %v108, 0.0
      %v165 = vsel %vm157, %v109, 0.0
      %v166 = vsel %vm158, %v110, 0.0
      %v167 = vsel %vm159, %v111, 0.0
      %v168 = vsel %vm160, %v112, 0.0
      %v169 = vld [vmem:[#allocation7] sm:$0xff]
      %v170 = vadd.f32 %v161, %v162
      %v171 = vadd.f32 %v170, %v163
      %v172 = vadd.f32 %v171, %v164
      %v173 = vadd.f32 %v172, %v165
      %v174 = vadd.f32 %v173, %v166
      %v175 = vadd.f32 %v174, %v167
      %v176 = vadd.f32 %v175, %v168
      %v177 = vadd.f32 %v169, %v176
      %178 = vst [vmem:[#allocation7] sm:$0xff] %v177
    $region29: #{tpu_custom_call.1} parent=1 // pred_fallthru
      _
    // Predicated region
    $region30: #{tpu_custom_call.1} parent=1 // pred_check
      _
    $region31: #{tpu_custom_call.1} parent=1 // pred_check_branch
      %180 = sbr.rel (0) target = $region33
    $region32: #{tpu_custom_call.1} parent=1 // pred_region
      %s182 = ssub.s32 128, 128
      %183 = vsyncadd [#allocation4], %s182
      %s185 = sshll.u32 [#allocation7], 4
      %s186 = int_to_ptr.vmem [resolvable:$true] %s185
      %188 = dma.vmem_to_hbm [thread:$0]  %s186, 128, %s2, [#allocation4]
    $region33: #{tpu_custom_call.1} parent=1 // pred_fallthru
      _
    // Predicated region
    $region34: #{tpu_custom_call.1} parent=1 // pred_check
      _
    $region35: #{tpu_custom_call.1} parent=1 // pred_check_branch
      %190 = sbr.rel (0) target = $region37
    $region36: #{tpu_custom_call.1} parent=1 // pred_region
      %191 = dma.done [#allocation4], 128
    $region37: #{tpu_custom_call.1} parent=1 // pred_fallthru
      _
    %192 = vsyncpa [#allocation3], 1
    %193 = vsyncpa [#allocation6], 1
    %194 = vsyncpa [#allocation4], 1

</llo_original>
